<compile_context>
chip_gen: v6e
topology: v6e:2x2x1
jax: 0.10.0
libtpu: 0.0.40
codegen_flags: <defaults>
</compile_context>

<pallas_src>
import math

import jax
import jax.numpy as jnp
from jax.experimental import pallas as pl
from jax.experimental.pallas import tpu as pltpu


# ---------------------------------------------------------------------------
# Kernels
# ---------------------------------------------------------------------------
def _accumulate_taps(x_prev, x_cur, x_next, x_mark, pe_ref,
                     w0_ref, w1_ref, w2_ref, wt_ref, o_ref):
    """y = x_prev@W0 + x_cur@W1 + x_next@W2 + x_mark@Wt + pe (f32 accumulate)."""
    bB, tL, c_in = x_cur.shape
    d_inp = x_mark.shape[-1]
    d_model = o_ref.shape[-1]
    M = bB * tL
    y = jnp.dot(x_cur.reshape(M, c_in), w1_ref[...],
                preferred_element_type=jnp.float32)
    y = y + jnp.dot(x_prev.reshape(M, c_in), w0_ref[...],
                    preferred_element_type=jnp.float32)
    y = y + jnp.dot(x_next.reshape(M, c_in), w2_ref[...],
                    preferred_element_type=jnp.float32)
    y = y + jnp.dot(x_mark.reshape(M, d_inp), wt_ref[...],
                    preferred_element_type=jnp.float32)
    y = y.reshape(bB, tL, d_model) + pe_ref[...]
    o_ref[...] = y.astype(o_ref.dtype)


def _fused_kernel(x_ref, xm_ref, pe_ref, w0_ref, w1_ref, w2_ref, wt_ref, o_ref):
    # tL == full L: the circular wrap stays inside this tile, so build the
    # +-1 shifts in VMEM (no extra HBM traffic).  jnp.roll with a static shift
    # lowers to a concat of two static slices; cost hides under the DMA.
    x = x_ref[...]
    x_prev = jnp.roll(x, 1, axis=1)      # x_prev[t] = x[t-1] (circular)
    x_next = jnp.roll(x, -1, axis=1)     # x_next[t] = x[t+1] (circular)
    _accumulate_taps(x_prev, x, x_next, xm_ref[...], pe_ref,
                     w0_ref, w1_ref, w2_ref, wt_ref, o_ref)


def _shifted_kernel(xp_ref, x_ref, xn_ref, xm_ref, pe_ref,
                    w0_ref, w1_ref, w2_ref, wt_ref, o_ref):
    # L-tiled fallback: circular shifts were precomputed by the wrapper.
    _accumulate_taps(xp_ref[...], x_ref[...], xn_ref[...], xm_ref[...], pe_ref,
                     w0_ref, w1_ref, w2_ref, wt_ref, o_ref)


# ---------------------------------------------------------------------------
# Tile sizing (VMEM-footprint aware, generation aware)
# ---------------------------------------------------------------------------
def _r8(n):
    return -(-n // 8) * 8


def _r128(n):
    return -(-n // 128) * 128


def _step_bytes(bB, tL, c_in, d_inp, d_model, n_x_inputs):
    """Estimated VMEM for one pipeline step: f32, lane-padded to 128 and
    sublane-padded to 8, double-buffered, plus in-kernel scratch (f32
    accumulator and the rolled input copies)."""
    item = 4
    tl8 = _r8(tL)
    dm = _r128(d_model)
    x_tile = bB * tl8 * _r128(c_in) * item
    xm_tile = bB * tl8 * _r128(d_inp) * item
    pe_tile = tl8 * dm * item
    o_tile = bB * tl8 * dm * item
    w_tiles = (3 * _r8(c_in) + _r8(d_inp)) * dm * item
    pipelined = 2 * (n_x_inputs * x_tile + xm_tile + pe_tile + o_tile + w_tiles)
    scratch = o_tile + 2 * x_tile
    return pipelined + scratch


def _vmem_budget():
    """(per-step budget, vmem_limit_bytes) for this TPU generation.  Falls back
    to conservative 64-MiB-VMEM-class numbers when the query is unavailable."""
    cap = None
    try:
        cap = int(pltpu.get_tpu_info().vmem_capacity_bytes)
    except Exception:
        cap = None
    if cap is not None and cap >= (100 << 20):   # v5e / v6e: 128 MiB VMEM
        return 48 << 20, 96 << 20
    return 20 << 20, 48 << 20                    # v7x-class: 64 MiB VMEM


def _largest_fitting_divisor(n, cap, fits):
    best = 1
    for d in range(1, min(n, cap) + 1):
        if n % d == 0 and fits(d):
            best = d
    return best


def _choose_tiles(B, L, c_in, d_inp, d_model, budget):
    """Return (mode, bB, tL, Lp)."""
    # Preferred: whole sequence per step, circular shifts in-kernel.
    if _step_bytes(1, L, c_in, d_inp, d_model, 1) <= budget:
        nB_target = min(B, 4)              # keep >= ~4 grid steps when B allows
        bB_cap = max(1, B // nB_target)
        if L % 8 != 0:
            bB_cap = 1                     # keep the (bB*L, c_in) merge trivial
        bB = _largest_fitting_divisor(
            B, bB_cap,
            lambda d: _step_bytes(d, L, c_in, d_inp, d_model, 1) <= budget)
        return "fused", bB, L, L

    # Fallback: tile the (padded) sequence; shifts precomputed in the wrapper.
    Lp = _r8(L)
    tL = 8
    for t in range(8, Lp + 1, 8):
        if Lp % t == 0 and _step_bytes(1, t, c_in, d_inp, d_model, 3) <= budget:
            tL = t
    nL = Lp // tL
    nB_target = max(1, min(B, -(-4 // nL)))
    bB_cap = max(1, B // nB_target)
    bB = _largest_fitting_divisor(
        B, bB_cap,
        lambda d: _step_bytes(d, tL, c_in, d_inp, d_model, 3) <= budget)
    return "shifted", bB, tL, Lp


# ---------------------------------------------------------------------------
# Wrapper
# ---------------------------------------------------------------------------
def data_embedding(x, x_mark, conv_w, lin_w, pe, *, budget_bytes=None):
    """DataEmbedding forward (dropout = identity / eval mode).

    x:      (B, L, c_in)       value series
    x_mark: (B, L, d_inp)      time features
    conv_w: (d_model, c_in, 3) TokenEmbedding Conv1d weight (circular, k=3)
    lin_w:  (d_model, d_inp)   TimeFeatureEmbedding Linear weight (no bias)
    pe:     (L, d_model)       positional-embedding table (first L rows)
    """
    B, L, c_in = x.shape
    d_inp = x_mark.shape[-1]
    d_model = conv_w.shape[0]

    # Per-tap weights in (in, out) matmul form:
    #   y[t] = x[t-1] @ W0 + x[t] @ W1 + x[t+1] @ W2   (circular over L)
    w0 = conv_w[:, :, 0].T
    w1 = conv_w[:, :, 1].T
    w2 = conv_w[:, :, 2].T
    wt = lin_w.T

    budget, vmem_limit = _vmem_budget()
    if budget_bytes is not None:
        budget = budget_bytes
    mode, bB, tL, Lp = _choose_tiles(B, L, c_in, d_inp, d_model, budget)
    grid = (Lp // tL, B // bB)     # batch axis innermost -> pe re-DMA skipped

    cparams = pltpu.CompilerParams(
        dimension_semantics=("parallel", "parallel"),
        vmem_limit_bytes=vmem_limit)

    # NOTE: if profiling on v7x still shows exposed DMA at step boundaries,
    # add pipeline_mode=pl.Buffered(3) to x_spec/xm_spec (re-check VMEM budget).
    x_spec = pl.BlockSpec((bB, tL, c_in), lambda l, b: (b, l, 0))
    xm_spec = pl.BlockSpec((bB, tL, d_inp), lambda l, b: (b, l, 0))
    pe_spec = pl.BlockSpec((tL, d_model), lambda l, b: (l, 0))
    o_spec = pl.BlockSpec((bB, tL, d_model), lambda l, b: (b, l, 0))
    w_specs = [
        pl.BlockSpec((c_in, d_model), lambda l, b: (0, 0)),
        pl.BlockSpec((c_in, d_model), lambda l, b: (0, 0)),
        pl.BlockSpec((c_in, d_model), lambda l, b: (0, 0)),
        pl.BlockSpec((d_inp, d_model), lambda l, b: (0, 0)),
    ]

    if mode == "fused":
        return pl.pallas_call(
            _fused_kernel,
            out_shape=jax.ShapeDtypeStruct((B, L, d_model), x.dtype),
            grid_spec=pltpu.PrefetchScalarGridSpec(
                num_scalar_prefetch=0,
                grid=grid,
                in_specs=[x_spec, xm_spec, pe_spec] + w_specs,
                out_specs=o_spec),
            compiler_params=cparams,
        )(x, x_mark, pe, w0, w1, w2, wt)

    # ---- L-tiled fallback (long sequences): shifts precomputed, no concat ----
    x_prev = jnp.roll(x, 1, axis=1)
    x_next = jnp.roll(x, -1, axis=1)
    xs = (x_prev, x, x_next)
    xm = x_mark
    pe_p = pe
    if Lp != L:                            # pad L to a multiple of 8 (zeros)
        padL = ((0, 0), (0, Lp - L), (0, 0))
        xs = tuple(jnp.pad(a, padL) for a in xs)
        xm = jnp.pad(x_mark, padL)
        pe_p = jnp.pad(pe, ((0, Lp - L), (0, 0)))

    out = pl.pallas_call(
        _shifted_kernel,
        out_shape=jax.ShapeDtypeStruct((B, Lp, d_model), x.dtype),
        grid_spec=pltpu.PrefetchScalarGridSpec(
            num_scalar_prefetch=0,
            grid=grid,
            in_specs=[x_spec, x_spec, x_spec, xm_spec, pe_spec] + w_specs,
            out_specs=o_spec),
        compiler_params=cparams,
    )(*xs, xm, pe_p, w0, w1, w2, wt)
    if Lp != L:
        out = out[:, :L, :]
    return out


# ---------------------------------------------------------------------------
# Reference / test
# ---------------------------------------------------------------------------
def make_positional_embedding(L, d_model):
    position = jnp.arange(L, dtype=jnp.float32)[:, None]
    div_term = jnp.exp(jnp.arange(0, d_model, 2, dtype=jnp.float32)
                       * (-math.log(10000.0) / d_model))
    pe = jnp.zeros((L, d_model), dtype=jnp.float32)
    pe = pe.at[:, 0::2].set(jnp.sin(position * div_term))
    pe = pe.at[:, 1::2].set(jnp.cos(position * div_term))
    return pe


def reference_forward(x, x_mark, conv_w, lin_w, pe):
    # Independent pure-JAX reference: circular pad + explicit conv taps.
    L = x.shape[1]
    xp = jnp.concatenate([x[:, -1:, :], x, x[:, :1, :]], axis=1)  # (B, L+2, c_in)
    v = sum(jnp.einsum('blc,dc->bld', xp[:, k:k + L, :], conv_w[:, :, k])
            for k in range(3))
    t = jnp.einsum('bli,di->bld', x_mark, lin_w)
    return v + t + pe[None, :, :]


if __name__ == "__main__":
    def run_case(B, L, c_in, d_inp, d_model, seed, budget_bytes=None):
        key = jax.random.PRNGKey(seed)
        kx, km, kc, kl = jax.random.split(key, 4)
        x = jax.random.normal(kx, (B, L, c_in), dtype=jnp.float32)
        x_mark = jax.random.normal(km, (B, L, d_inp), dtype=jnp.float32)

        # Conv1d weight (d_model, c_in, 3), kaiming_normal_(fan_in, leaky_relu)
        fan_in = c_in * 3
        gain = math.sqrt(2.0 / (1.0 + 0.01 ** 2))
        conv_w = gain / math.sqrt(fan_in) * jax.random.normal(
            kc, (d_model, c_in, 3), dtype=jnp.float32)

        # Linear weight (d_model, d_inp), default torch uniform init (bias=False)
        bound = 1.0 / math.sqrt(d_inp)
        lin_w = jax.random.uniform(kl, (d_model, d_inp), dtype=jnp.float32,
                                   minval=-bound, maxval=bound)

        pe = make_positional_embedding(L, d_model)

        out = data_embedding(x, x_mark, conv_w, lin_w, pe,
                             budget_bytes=budget_bytes)
        out = jax.block_until_ready(out)
        ref = reference_forward(x, x_mark, conv_w, lin_w, pe)
        assert out.shape == (B, L, d_model), out.shape
        err = jnp.max(jnp.abs(out - ref))
        assert jnp.allclose(out, ref, atol=1e-5, rtol=1e-5), \
            f"max abs err {err}"

    # Common path: whole sequence per grid step, circular shifts in-kernel.
    run_case(B=2, L=16, c_in=8, d_inp=5, d_model=32, seed=0)
    # Fallback path: L tiled (forced via a tiny budget), L not a multiple of 8.
    run_case(B=2, L=20, c_in=8, d_inp=5, d_model=32, seed=1,
             budget_bytes=100 * 1024)

    print("KERNEL_OK")
</pallas_src>

<mosaic_0001>
module attributes {stable_mosaic.version = 11 : i64} {
  func.func @_fused_kernel(%arg0: i32, %arg1: i32, %arg2: memref<1x16x8xf32, #tpu.memory_space<vmem>>, %arg3: memref<1x16x5xf32, #tpu.memory_space<vmem>>, %arg4: memref<16x32xf32, #tpu.memory_space<vmem>>, %arg5: memref<8x32xf32, #tpu.memory_space<vmem>>, %arg6: memref<8x32xf32, #tpu.memory_space<vmem>>, %arg7: memref<8x32xf32, #tpu.memory_space<vmem>>, %arg8: memref<5x32xf32, #tpu.memory_space<vmem>>, %arg9: memref<1x16x32xf32, #tpu.memory_space<vmem>>) attributes {dimension_semantics = [#tpu.dimension_semantics<parallel>, #tpu.dimension_semantics<parallel>], iteration_bounds = array<i64: 1, 2>, scalar_prefetch = 0 : i64, scratch_operands = 0 : i64, tpu.core_type = #tpu.core_type<tc>, window_params = [{transform_indices = @transform_0, window_bounds = array<i64: 1, 16, 8>}, {transform_indices = @transform_1, window_bounds = array<i64: 1, 16, 5>}, {transform_indices = @transform_2, window_bounds = array<i64: 16, 32>}, {pipeline_mode = #tpu.pipeline_mode<synchronous>, transform_indices = @transform_3, window_bounds = array<i64: 8, 32>}, {pipeline_mode = #tpu.pipeline_mode<synchronous>, transform_indices = @transform_4, window_bounds = array<i64: 8, 32>}, {pipeline_mode = #tpu.pipeline_mode<synchronous>, transform_indices = @transform_5, window_bounds = array<i64: 8, 32>}, {pipeline_mode = #tpu.pipeline_mode<synchronous>, transform_indices = @transform_6, window_bounds = array<i64: 5, 32>}, {transform_indices = @transform_7, window_bounds = array<i64: 1, 16, 32>}]} {
    %c0 = arith.constant 0 : index
    %c0_0 = arith.constant 0 : index
    %c0_1 = arith.constant 0 : index
    %0 = vector.load %arg2[%c0, %c0_0, %c0_1] : memref<1x16x8xf32, #tpu.memory_space<vmem>>, vector<1x16x8xf32>
    %1 = vector.extract_strided_slice %0 {offsets = [0, 15, 0], sizes = [1, 1, 8], strides = [1, 1, 1]} : vector<1x16x8xf32> to vector<1x1x8xf32>
    %2 = vector.extract_strided_slice %0 {offsets = [0, 0, 0], sizes = [1, 15, 8], strides = [1, 1, 1]} : vector<1x16x8xf32> to vector<1x15x8xf32>
    %3 = tpu.concatenate %1, %2 in 1 : vector<1x1x8xf32>, vector<1x15x8xf32> -> vector<1x16x8xf32>
    %4 = vector.extract_strided_slice %0 {offsets = [0, 1, 0], sizes = [1, 15, 8], strides = [1, 1, 1]} : vector<1x16x8xf32> to vector<1x15x8xf32>
    %5 = vector.extract_strided_slice %0 {offsets = [0, 0, 0], sizes = [1, 1, 8], strides = [1, 1, 1]} : vector<1x16x8xf32> to vector<1x1x8xf32>
    %6 = tpu.concatenate %4, %5 in 1 : vector<1x15x8xf32>, vector<1x1x8xf32> -> vector<1x16x8xf32>
    %c0_2 = arith.constant 0 : index
    %c0_3 = arith.constant 0 : index
    %c0_4 = arith.constant 0 : index
    %7 = vector.load %arg3[%c0_2, %c0_3, %c0_4] : memref<1x16x5xf32, #tpu.memory_space<vmem>>, vector<1x16x5xf32>
    %8 = vector.shape_cast %0 : vector<1x16x8xf32> to vector<16x8xf32>
    %c0_5 = arith.constant 0 : index
    %c0_6 = arith.constant 0 : index
    %9 = vector.load %arg6[%c0_5, %c0_6] : memref<8x32xf32, #tpu.memory_space<vmem>>, vector<8x32xf32>
    %cst = arith.constant dense<0.000000e+00> : vector<16x32xf32>
    %10 = tpu.matmul %8, %9, %cst {dimension_numbers = #tpu.dot_dimension_numbers<[1], [0], [0], [1], [0, 0, 1, 1], [], []>} : vector<16x8xf32>, vector<8x32xf32>, vector<16x32xf32> -> vector<16x32xf32>
    %11 = vector.shape_cast %3 : vector<1x16x8xf32> to vector<16x8xf32>
    %c0_7 = arith.constant 0 : index
    %c0_8 = arith.constant 0 : index
    %12 = vector.load %arg5[%c0_7, %c0_8] : memref<8x32xf32, #tpu.memory_space<vmem>>, vector<8x32xf32>
    %cst_9 = arith.constant dense<0.000000e+00> : vector<16x32xf32>
    %13 = tpu.matmul %11, %12, %cst_9 {dimension_numbers = #tpu.dot_dimension_numbers<[1], [0], [0], [1], [0, 0, 1, 1], [], []>} : vector<16x8xf32>, vector<8x32xf32>, vector<16x32xf32> -> vector<16x32xf32>
    %14 = arith.addf %10, %13 : vector<16x32xf32>
    %15 = vector.shape_cast %6 : vector<1x16x8xf32> to vector<16x8xf32>
    %c0_10 = arith.constant 0 : index
    %c0_11 = arith.constant 0 : index
    %16 = vector.load %arg7[%c0_10, %c0_11] : memref<8x32xf32, #tpu.memory_space<vmem>>, vector<8x32xf32>
    %cst_12 = arith.constant dense<0.000000e+00> : vector<16x32xf32>
    %17 = tpu.matmul %15, %16, %cst_12 {dimension_numbers = #tpu.dot_dimension_numbers<[1], [0], [0], [1], [0, 0, 1, 1], [], []>} : vector<16x8xf32>, vector<8x32xf32>, vector<16x32xf32> -> vector<16x32xf32>
    %18 = arith.addf %14, %17 : vector<16x32xf32>
    %19 = vector.shape_cast %7 : vector<1x16x5xf32> to vector<16x5xf32>
    %c0_13 = arith.constant 0 : index
    %c0_14 = arith.constant 0 : index
    %20 = vector.load %arg8[%c0_13, %c0_14] : memref<5x32xf32, #tpu.memory_space<vmem>>, vector<5x32xf32>
    %cst_15 = arith.constant dense<0.000000e+00> : vector<16x32xf32>
    %21 = tpu.matmul %19, %20, %cst_15 {dimension_numbers = #tpu.dot_dimension_numbers<[1], [0], [0], [1], [0, 0, 1, 1], [], []>} : vector<16x5xf32>, vector<5x32xf32>, vector<16x32xf32> -> vector<16x32xf32>
    %22 = arith.addf %18, %21 : vector<16x32xf32>
    %23 = vector.shape_cast %22 : vector<16x32xf32> to vector<1x16x32xf32>
    %c0_16 = arith.constant 0 : index
    %c0_17 = arith.constant 0 : index
    %24 = vector.load %arg4[%c0_16, %c0_17] : memref<16x32xf32, #tpu.memory_space<vmem>>, vector<16x32xf32>
    %25 = vector.shape_cast %24 : vector<16x32xf32> to vector<1x16x32xf32>
    %26 = arith.addf %23, %25 : vector<1x16x32xf32>
    %c0_18 = arith.constant 0 : index
    %c0_19 = arith.constant 0 : index
    %c0_20 = arith.constant 0 : index
    %27 = vector.load %arg9[%c0_18, %c0_19, %c0_20] : memref<1x16x32xf32, #tpu.memory_space<vmem>>, vector<1x16x32xf32>
    tpu.vector_store %arg9[%c0_18, %c0_19, %c0_20], %26 {strides = array<i32>} : memref<1x16x32xf32, #tpu.memory_space<vmem>>, vector<1x16x32xf32>,
    return
  }
  func.func @transform_0(%arg0: i32, %arg1: i32) -> (i32, i32, i32) {
    %c0_i32 = arith.constant 0 : i32
    %c0_i32_0 = arith.constant 0 : i32
    return %arg1, %arg0, %c0_i32 : i32, i32, i32
  }
  func.func @transform_1(%arg0: i32, %arg1: i32) -> (i32, i32, i32) {
    %c0_i32 = arith.constant 0 : i32
    %c0_i32_0 = arith.constant 0 : i32
    return %arg1, %arg0, %c0_i32 : i32, i32, i32
  }
  func.func @transform_2(%arg0: i32, %arg1: i32) -> (i32, i32) {
    %c0_i32 = arith.constant 0 : i32
    %c0_i32_0 = arith.constant 0 : i32
    return %arg0, %c0_i32 : i32, i32
  }
  func.func @transform_3(%arg0: i32, %arg1: i32) -> (i32, i32) {
    %c0_i32 = arith.constant 0 : i32
    %c0_i32_0 = arith.constant 0 : i32
    %c0_i32_1 = arith.constant 0 : i32
    return %c0_i32, %c0_i32_0 : i32, i32
  }
  func.func @transform_4(%arg0: i32, %arg1: i32) -> (i32, i32) {
    %c0_i32 = arith.constant 0 : i32
    %c0_i32_0 = arith.constant 0 : i32
    %c0_i32_1 = arith.constant 0 : i32
    return %c0_i32, %c0_i32_0 : i32, i32
  }
  func.func @transform_5(%arg0: i32, %arg1: i32) -> (i32, i32) {
    %c0_i32 = arith.constant 0 : i32
    %c0_i32_0 = arith.constant 0 : i32
    %c0_i32_1 = arith.constant 0 : i32
    return %c0_i32, %c0_i32_0 : i32, i32
  }
  func.func @transform_6(%arg0: i32, %arg1: i32) -> (i32, i32) {
    %c0_i32 = arith.constant 0 : i32
    %c0_i32_0 = arith.constant 0 : i32
    %c0_i32_1 = arith.constant 0 : i32
    return %c0_i32, %c0_i32_0 : i32, i32
  }
  func.func @transform_7(%arg0: i32, %arg1: i32) -> (i32, i32, i32) {
    %c0_i32 = arith.constant 0 : i32
    %c0_i32_0 = arith.constant 0 : i32
    return %arg1, %arg0, %c0_i32 : i32, i32, i32
  }
}

</mosaic_0001>

<llo_original>
// kernel: tpu_custom_call.1
$region0: #{tpu_custom_call.1}
  #allocation0 [shape = 'u32[]', space=smem, size = 0x4, offset = 0x4, fixed_abs, tag = 'smem constant byte address 0x4 - core index']
  #allocation1 [shape = 'u32[144,128]{1,0:T(1,128)}', space=vmem, size = 0x12000, scoped, tag = 'internal scratch']
  %s0 = inlined_call_operand.vmem [shape: f32[2,16,8], index: 0, kind: input, shape index: {}]
  %s1 = inlined_call_operand.vmem [shape: f32[2,16,5], index: 1, kind: input, shape index: {}]
  %s2 = inlined_call_operand.vmem [shape: f32[16,32], index: 2, kind: input, shape index: {}]
  %s3 = inlined_call_operand.vmem [shape: f32[8,32], index: 3, kind: input, shape index: {}]
  %s4 = inlined_call_operand.vmem [shape: f32[8,32], index: 4, kind: input, shape index: {}]
  %s5 = inlined_call_operand.vmem [shape: f32[8,32], index: 5, kind: input, shape index: {}]
  %s6 = inlined_call_operand.vmem [shape: f32[5,32], index: 6, kind: input, shape index: {}]
  %s7 = inlined_call_operand.hbm [shape: f32[2,16,32], index: 7, kind: output, shape index: {}]
  %s8 = sld [smem:[#allocation0]]
  $region61: #{tpu_custom_call.1} parent=0
    _
  %s10 = ssub.s32 1, %s8
  %s11 = scalar_select 0, %s10, %s8
  $region1: #{tpu_custom_call.1} parent=0
    #allocation2 [shape = 'u8[16384]{0}', space=vmem, size = 0x4000, scoped, tag = 'output window, operand 0']
    #allocation3 [shape = 's32[2]{0}', space=sflag, size = 0x8, scoped, tag = 'scoped memory for tpu_custom_call.1']
    %12 = vsyncpa [#allocation3], 0
    %s13 = scalar_lea.sflag [#allocation3], 1
    %14 = vsyncpa %s13, 0
    loop: start=0, step=1, limit=4
    $region2: #{tpu_custom_call.1} parent=1 // loop_pre_header
      _
    $region3: #{tpu_custom_call.1} parent=1 // loop_header
      %s16 = sphi 0, %s20
      %p17 = scmp.ge.s32.totalorder %s16, 4
      %s23 = sphi 0, %s35
      %s24 = sphi 0, %s31
      %s25 = sphi 0, %s23
      %s26 = sphi 0, %s24
      %s27 = sphi 0, %s25
      %s28 = sphi 0, %s26
      %s40 = sphi 0, %s42
      %s43 = sphi 0, %s40
      %s44 = sphi 0, %s43
      %s60 = sphi 0, %s44
      %s68 = sphi 0, %s70
      %s71 = sphi 0, %s68
      %s72 = sphi 0, %s71
      %s88 = sphi 0, %s72
      %s94 = sphi 0, %s96
      %s97 = sphi 0, %s94
      %s98 = sphi 0, %s97
      %s114 = sphi 0, %s98
      %s118 = sphi 0, %s118
      %s120 = sphi 0, %s118
      %s121 = sphi 0, %s120
      %s135 = sphi 0, %s121
      %s139 = sphi 0, %s139
      %s141 = sphi 0, %s139
      %s142 = sphi 0, %s141
      %s156 = sphi 0, %s142
      %s160 = sphi 0, %s160
      %s162 = sphi 0, %s160
      %s163 = sphi 0, %s162
      %s177 = sphi 0, %s163
      %s181 = sphi 0, %s181
      %s183 = sphi 0, %s181
      %s184 = sphi 0, %s183
      %s198 = sphi 0, %s184
      %s206 = sphi 0, %s208
      %s209 = sphi 0, %s206
      %s210 = sphi 0, %s209
      %s226 = sphi 0, %s210
    $region4: #{tpu_custom_call.1} parent=1 // loop_header_branch
      %19 = sbr.rel (%p17) target = $region8
    $region5: #{tpu_custom_call.1} parent=1 // loop_body
      %s21 = ssub.s32 %s16, 1
      %s22 = ssub.s32 %s16, 2
      %s29 = sadd.s32 1, %s24
      %p30 = scmp.ge.s32.totalorder %s29, 2
      %s31 = scalar_select %p30, 0, %s29
      %s32 = sadd.s32 1, %s23
      %s33 = scalar_select %p30, %s32, %s23
      %p34 = scmp.ge.s32.totalorder %s33, 1
      %s35 = scalar_select %p34, 0, %s33
      %s36 = ssub.s32 %s24, %s31
      %s37 = ssub.s32 %s23, %s35
      %s38 = sor.u32 %s36, %s37
      %p39 = scmp.eq.s32.totalorder %s38, 0
      %s41 = sadd.s32 %s40, 1
      %s42 = scalar_select %p39, %s40, %s41
      %p45 = pneg %p39
      %p46 = scmp.eq.s32.totalorder %s16, 1
      %p47 = por %p45, %p46
      %p48 = scmp.ne.s32.totalorder %s40, %s43
      %p49 = scmp.eq.s32.totalorder %s16, 0
      %p50 = por %p48, %p49
      %p51 = scmp.ne.s32.totalorder %s40, %s43
      %p52 = scmp.eq.s32.totalorder %s21, 1
      %p53 = por %p51, %p52
      %p54 = scmp.ne.s32.totalorder %s43, %s44
      %p55 = scmp.eq.s32.totalorder %s21, 0
      %p56 = por %p54, %p55
      %p57 = scmp.ne.s32.totalorder %s43, %s44
      %p58 = scmp.eq.s32.totalorder %s22, 1
      %p59 = por %p57, %p58
      %p61 = scmp.ne.s32.totalorder %s44, %s60
      %p62 = scmp.eq.s32.totalorder %s22, 0
      %p63 = por %p61, %p62
      %s64 = ssub.s32 %s24, %s31
      %s65 = ssub.s32 %s23, %s35
      %s66 = sor.u32 %s64, %s65
      %p67 = scmp.eq.s32.totalorder %s66, 0
      %s69 = sadd.s32 %s68, 1
      %s70 = scalar_select %p67, %s68, %s69
      %p73 = pneg %p67
      %p74 = scmp.eq.s32.totalorder %s16, 1
      %p75 = por %p73, %p74
      %p76 = scmp.ne.s32.totalorder %s68, %s71
      %p77 = scmp.eq.s32.totalorder %s16, 0
      %p78 = por %p76, %p77
      %p79 = scmp.ne.s32.totalorder %s68, %s71
      %p80 = scmp.eq.s32.totalorder %s21, 1
      %p81 = por %p79, %p80
      %p82 = scmp.ne.s32.totalorder %s71, %s72
      %p83 = scmp.eq.s32.totalorder %s21, 0
      %p84 = por %p82, %p83
      %p85 = scmp.ne.s32.totalorder %s71, %s72
      %p86 = scmp.eq.s32.totalorder %s22, 1
      %p87 = por %p85, %p86
      %p89 = scmp.ne.s32.totalorder %s72, %s88
      %p90 = scmp.eq.s32.totalorder %s22, 0
      %p91 = por %p89, %p90
      %s92 = ssub.s32 %s23, %s35
      %p93 = scmp.eq.s32.totalorder %s92, 0
      %s95 = sadd.s32 %s94, 1
      %s96 = scalar_select %p93, %s94, %s95
      %p99 = pneg %p93
      %p100 = scmp.eq.s32.totalorder %s16, 1
      %p101 = por %p99, %p100
      %p102 = scmp.ne.s32.totalorder %s94, %s97
      %p103 = scmp.eq.s32.totalorder %s16, 0
      %p104 = por %p102, %p103
      %p105 = scmp.ne.s32.totalorder %s94, %s97
      %p106 = scmp.eq.s32.totalorder %s21, 1
      %p107 = por %p105, %p106
      %p108 = scmp.ne.s32.totalorder %s97, %s98
      %p109 = scmp.eq.s32.totalorder %s21, 0
      %p110 = por %p108, %p109
      %p111 = scmp.ne.s32.totalorder %s97, %s98
      %p112 = scmp.eq.s32.totalorder %s22, 1
      %p113 = por %p111, %p112
      %p115 = scmp.ne.s32.totalorder %s98, %s114
      %p116 = scmp.eq.s32.totalorder %s22, 0
      %p117 = por %p115, %p116
      %s119 = sadd.s32 %s118, 1
      %p122 = scmp.eq.s32.totalorder %s16, 1
      %p123 = scmp.ne.s32.totalorder %s118, %s120
      %p124 = scmp.eq.s32.totalorder %s16, 0
      %p125 = por %p123, %p124
      %p126 = scmp.ne.s32.totalorder %s118, %s120
      %p127 = scmp.eq.s32.totalorder %s21, 1
      %p128 = por %p126, %p127
      %p129 = scmp.ne.s32.totalorder %s120, %s121
      %p130 = scmp.eq.s32.totalorder %s21, 0
      %p131 = por %p129, %p130
      %p132 = scmp.ne.s32.totalorder %s120, %s121
      %p133 = scmp.eq.s32.totalorder %s22, 1
      %p134 = por %p132, %p133
      %p136 = scmp.ne.s32.totalorder %s121, %s135
      %p137 = scmp.eq.s32.totalorder %s22, 0
      %p138 = por %p136, %p137
      %s140 = sadd.s32 %s139, 1
      %p143 = scmp.eq.s32.totalorder %s16, 1
      %p144 = scmp.ne.s32.totalorder %s139, %s141
      %p145 = scmp.eq.s32.totalorder %s16, 0
      %p146 = por %p144, %p145
      %p147 = scmp.ne.s32.totalorder %s139, %s141
      %p148 = scmp.eq.s32.totalorder %s21, 1
      %p149 = por %p147, %p148
      %p150 = scmp.ne.s32.totalorder %s141, %s142
      %p151 = scmp.eq.s32.totalorder %s21, 0
      %p152 = por %p150, %p151
      %p153 = scmp.ne.s32.totalorder %s141, %s142
      %p154 = scmp.eq.s32.totalorder %s22, 1
      %p155 = por %p153, %p154
      %p157 = scmp.ne.s32.totalorder %s142, %s156
      %p158 = scmp.eq.s32.totalorder %s22, 0
      %p159 = por %p157, %p158
      %s161 = sadd.s32 %s160, 1
      %p164 = scmp.eq.s32.totalorder %s16, 1
      %p165 = scmp.ne.s32.totalorder %s160, %s162
      %p166 = scmp.eq.s32.totalorder %s16, 0
      %p167 = por %p165, %p166
      %p168 = scmp.ne.s32.totalorder %s160, %s162
      %p169 = scmp.eq.s32.totalorder %s21, 1
      %p170 = por %p168, %p169
      %p171 = scmp.ne.s32.totalorder %s162, %s163
      %p172 = scmp.eq.s32.totalorder %s21, 0
      %p173 = por %p171, %p172
      %p174 = scmp.ne.s32.totalorder %s162, %s163
      %p175 = scmp.eq.s32.totalorder %s22, 1
      %p176 = por %p174, %p175
      %p178 = scmp.ne.s32.totalorder %s163, %s177
      %p179 = scmp.eq.s32.totalorder %s22, 0
      %p180 = por %p178, %p179
      %s182 = sadd.s32 %s181, 1
      %p185 = scmp.eq.s32.totalorder %s16, 1
      %p186 = scmp.ne.s32.totalorder %s181, %s183
      %p187 = scmp.eq.s32.totalorder %s16, 0
      %p188 = por %p186, %p187
      %p189 = scmp.ne.s32.totalorder %s181, %s183
      %p190 = scmp.eq.s32.totalorder %s21, 1
      %p191 = por %p189, %p190
      %p192 = scmp.ne.s32.totalorder %s183, %s184
      %p193 = scmp.eq.s32.totalorder %s21, 0
      %p194 = por %p192, %p193
      %p195 = scmp.ne.s32.totalorder %s183, %s184
      %p196 = scmp.eq.s32.totalorder %s22, 1
      %p197 = por %p195, %p196
      %p199 = scmp.ne.s32.totalorder %s184, %s198
      %p200 = scmp.eq.s32.totalorder %s22, 0
      %p201 = por %p199, %p200
      %s202 = ssub.s32 %s24, %s31
      %s203 = ssub.s32 %s23, %s35
      %s204 = sor.u32 %s202, %s203
      %p205 = scmp.eq.s32.totalorder %s204, 0
      %s207 = sadd.s32 %s206, 1
      %s208 = scalar_select %p205, %s206, %s207
      %p211 = pneg %p205
      %p212 = scmp.eq.s32.totalorder %s16, 1
      %p213 = por %p211, %p212
      %p214 = scmp.ne.s32.totalorder %s206, %s209
      %p215 = scmp.eq.s32.totalorder %s16, 0
      %p216 = por %p214, %p215
      %p217 = scmp.ne.s32.totalorder %s206, %s209
      %p218 = scmp.eq.s32.totalorder %s21, 1
      %p219 = por %p217, %p218
      %p220 = scmp.ne.s32.totalorder %s209, %s210
      %p221 = scmp.eq.s32.totalorder %s21, 0
      %p222 = por %p220, %p221
      %p223 = scmp.ne.s32.totalorder %s209, %s210
      %p224 = scmp.eq.s32.totalorder %s22, 1
      %p225 = por %p223, %p224
      %p227 = scmp.ne.s32.totalorder %s210, %s226
      %p228 = scmp.eq.s32.totalorder %s22, 0
      %p229 = por %p227, %p228
      %p230 = scmp.le.s32.totalorder 1, %s16
      %p231 = scmp.lt.s32.totalorder %s16, 3
      %p232 = pnand %p230, %p231
      %p233 = pneg %p232
      // Predicated region
      $region9: #{tpu_custom_call.1} parent=5 // pred_check
        _
      $region10: #{tpu_custom_call.1} parent=5 // pred_check_branch
        %235 = sbr.rel (%p232) target = $region12
      $region11: #{tpu_custom_call.1} parent=5 // pred_region
        %s236 = ssub.s32 %s16, 1
        // Predicated region
        $region13: #{tpu_custom_call.1} parent=11 // pred_check
          %p237 = pneg %p110
        $region14: #{tpu_custom_call.1} parent=11 // pred_check_branch
          %239 = sbr.rel (%p237) target = $region16
        $region15: #{tpu_custom_call.1} parent=11 // pred_region
          %s240 = smul.u32 2, %s25
          %p241 = scmp.lt.s32.totalorder %s240, 1
          %s242 = scalar_select %p241, %s240, 1
          %s243 = smul.addr %s242, 8
          %s244 = scalar_lea.vmem %s2, %s243
          %s245 = smul.u32 2, %s25
        $region16: #{tpu_custom_call.1} parent=11 // pred_fallthru
          _
        // Predicated region
        $region17: #{tpu_custom_call.1} parent=11 // pred_check
          %p246 = pneg %p131
        $region18: #{tpu_custom_call.1} parent=11 // pred_check_branch
          %248 = sbr.rel (%p246) target = $region20
        $region19: #{tpu_custom_call.1} parent=11 // pred_region
          _
        $region20: #{tpu_custom_call.1} parent=11 // pred_fallthru
          _
        // Predicated region
        $region21: #{tpu_custom_call.1} parent=11 // pred_check
          %p249 = pneg %p152
        $region22: #{tpu_custom_call.1} parent=11 // pred_check_branch
          %251 = sbr.rel (%p249) target = $region24
        $region23: #{tpu_custom_call.1} parent=11 // pred_region
          _
        $region24: #{tpu_custom_call.1} parent=11 // pred_fallthru
          _
        // Predicated region
        $region25: #{tpu_custom_call.1} parent=11 // pred_check
          %p252 = pneg %p173
        $region26: #{tpu_custom_call.1} parent=11 // pred_check_branch
          %254 = sbr.rel (%p252) target = $region28
        $region27: #{tpu_custom_call.1} parent=11 // pred_region
          _
        $region28: #{tpu_custom_call.1} parent=11 // pred_fallthru
          _
        // Predicated region
        $region29: #{tpu_custom_call.1} parent=11 // pred_check
          %p255 = pneg %p194
        $region30: #{tpu_custom_call.1} parent=11 // pred_check_branch
          %257 = sbr.rel (%p255) target = $region32
        $region31: #{tpu_custom_call.1} parent=11 // pred_region
          _
        $region32: #{tpu_custom_call.1} parent=11 // pred_fallthru
          _
      $region12: #{tpu_custom_call.1} parent=5 // pred_fallthru
        _
      %p258 = scmp.lt.s32.totalorder %s16, 2
      // Predicated region
      $region33: #{tpu_custom_call.1} parent=5 // pred_check
        %p259 = pneg %p258
      $region34: #{tpu_custom_call.1} parent=5 // pred_check_branch
        %261 = sbr.rel (%p259) target = $region36
      $region35: #{tpu_custom_call.1} parent=5 // pred_region
        // Predicated region
        $region37: #{tpu_custom_call.1} parent=35 // pred_check
          %p262 = pneg %p50
        $region38: #{tpu_custom_call.1} parent=35 // pred_check_branch
          %264 = sbr.rel (%p262) target = $region40
        $region39: #{tpu_custom_call.1} parent=35 // pred_region
          %s265 = smul.u32 2, %s23
          %p266 = scmp.lt.s32.totalorder %s24, 1
          %s267 = scalar_select %p266, %s24, 1
          %p268 = scmp.lt.s32.totalorder %s265, 1
          %s269 = scalar_select %p268, %s265, 1
          %s270 = smul.addr %s267, 2
          %s271 = sadd.s32 %s269, %s270
          %s272 = smul.addr %s271, 8
          %s273 = scalar_lea.vmem %s0, %s272
          %s274 = smul.u32 2, %s23
        $region40: #{tpu_custom_call.1} parent=35 // pred_fallthru
          _
        // Predicated region
        $region41: #{tpu_custom_call.1} parent=35 // pred_check
          %p275 = pneg %p78
        $region42: #{tpu_custom_call.1} parent=35 // pred_check_branch
          %277 = sbr.rel (%p275) target = $region44
        $region43: #{tpu_custom_call.1} parent=35 // pred_region
          %s278 = smul.u32 2, %s23
          %p279 = scmp.lt.s32.totalorder %s24, 1
          %s280 = scalar_select %p279, %s24, 1
          %p281 = scmp.lt.s32.totalorder %s278, 1
          %s282 = scalar_select %p281, %s278, 1
          %s283 = smul.addr %s280, 2
          %s284 = sadd.s32 %s282, %s283
          %s285 = smul.addr %s284, 8
          %s286 = scalar_lea.vmem %s1, %s285
          %s287 = smul.u32 2, %s23
        $region44: #{tpu_custom_call.1} parent=35 // pred_fallthru
          _
      $region36: #{tpu_custom_call.1} parent=5 // pred_fallthru
        _
      %p288 = scmp.le.s32.totalorder 1, %s16
      %p289 = scmp.lt.s32.totalorder %s16, 3
      %p290 = pnand %p288, %p289
      %p291 = pneg %p290
      // Predicated region
      $region45: #{tpu_custom_call.1} parent=5 // pred_check
        _
      $region46: #{tpu_custom_call.1} parent=5 // pred_check_branch
        %293 = sbr.rel (%p290) target = $region48
      $region47: #{tpu_custom_call.1} parent=5 // pred_region
        %s294 = ssub.s32 %s16, 1
        %s295 = smul.u32 2, %s25
        %p296 = scmp.lt.s32.totalorder %s26, 1
        %s297 = scalar_select %p296, %s26, 1
        %p298 = scmp.lt.s32.totalorder %s295, 1
        %s299 = scalar_select %p298, %s295, 1
        %s300 = smul.addr %s297, 2
        %s301 = sadd.s32 %s299, %s300
        %s302 = smul.addr %s301, 8
        %s303 = scalar_lea.vmem %s0, %s302
        %p304 = pneg %p56
        %p305 = pneg %p53
        %s306 = smul.u32 2, %s25
        %p307 = scmp.lt.s32.totalorder %s26, 1
        %s308 = scalar_select %p307, %s26, 1
        %p309 = scmp.lt.s32.totalorder %s306, 1
        %s310 = scalar_select %p309, %s306, 1
        %s311 = smul.addr %s308, 2
        %s312 = sadd.s32 %s310, %s311
        %s313 = smul.addr %s312, 8
        %s314 = scalar_lea.vmem %s1, %s313
        %p315 = pneg %p84
        %p316 = pneg %p81
        %s317 = smul.u32 2, %s25
        %p318 = scmp.lt.s32.totalorder %s317, 1
        %s319 = scalar_select %p318, %s317, 1
        %s320 = smul.addr %s319, 8
        %s321 = scalar_lea.vmem %s2, %s320
        %p322 = pneg %p110
        %p323 = pneg %p107
        %p324 = pneg %p131
        %p325 = pneg %p128
        %p326 = pneg %p152
        %p327 = pneg %p149
        %p328 = pneg %p173
        %p329 = pneg %p170
        %p330 = pneg %p194
        %p331 = pneg %p191
        %p332 = pneg %p222
        %p333 = pneg %p219
        %s334 = sand.u32 %s209, 1
        %s335 = scalar_lea.sflag [#allocation3], %s334
        %s336 = sand.u32 %s209, 1
        %s337 = smul.addr %s336, 16
        %s338 = scalar_lea.vmem [#allocation2], %s337
        %s339 = smul.u32 2, %s25
        %p340 = scmp.lt.s32.totalorder %s26, 1
        %s341 = scalar_select %p340, %s26, 1
        %p342 = scmp.lt.s32.totalorder %s339, 1
        %s343 = scalar_select %p342, %s339, 1
        %s344 = smul.addr %s341, 2
        %s345 = sadd.s32 %s343, %s344
        %s346 = smul.addr %s345, 8
        %s347 = scalar_lea.vmem %s0, %s346
        %s348 = smul.u32 2, %s25
        %s349 = smul.u32 2, %s25
        %p350 = scmp.lt.s32.totalorder %s26, 1
        %s351 = scalar_select %p350, %s26, 1
        %p352 = scmp.lt.s32.totalorder %s349, 1
        %s353 = scalar_select %p352, %s349, 1
        %s354 = smul.addr %s351, 2
        %s355 = sadd.s32 %s353, %s354
        %s356 = smul.addr %s355, 8
        %s357 = scalar_lea.vmem %s1, %s356
        %s358 = smul.u32 2, %s25
        %s359 = smul.u32 2, %s25
        %p360 = scmp.lt.s32.totalorder %s359, 1
        %s361 = scalar_select %p360, %s359, 1
        %s362 = smul.addr %s361, 8
        %s363 = scalar_lea.vmem %s2, %s362
        %s364 = smul.u32 2, %s25
        %s365 = smul.u32 2, %s25
        %v366 = vld [vmem:[%s347] sm:$0xff]
        %v367 = vld [vmem:[%s347 + $0x8] sm:$0xff]
        %v369 = vrot.slane %v367, 7
        %vm372 = vcmask 1040384
        %v373 = vrot.slane %v366, 7
        %v374 = vsel %vm372, %v373, %v369
        %v376 = vsel %vm372, %v369, %v373
        %vm377 = vcmask 1046528
        %v378 = vrot.slane %v366, 1
        %v379 = vrot.slane %v367, 1
        %v380 = vsel %vm377, %v378, %v379
        %v383 = vsel %vm377, %v379, %v378
        %v384 = vld [vmem:[%s357] sm:$0xff]
        %v385 = vld [vmem:[%s357 + $0x8] sm:$0xff]
        %v386 = vld [vmem:[%s4] sm:$0xff]
        %v387 = vld [vmem:[%s3] sm:$0xff]
        %vm388 = vcmask 64512
        %v390 = vsel %vm388, %v376, 0
        %v392 = vsel %vm388, %v374, 0
        %394 = vmatprep.subr.mxu0 0.0
        %395 = vmatpush1.msra.mxu0 0.0
        %396 = vmatprep.subr.mxu0 0.0
        %397 = vmatpush1.msra.mxu0 0.0
        %398 = vmatprep.subr.mxu0 0.0
        %399 = vmatpush1.msra.mxu0 0.0
        %400 = vmatprep.subr.mxu0 0.0
        %401 = vmatpush1.msra.mxu0 0.0
        %402 = vmatprep.subr.mxu0 0.0
        %403 = vmatpush1.msra.mxu0 0.0
        %404 = vmatprep.subr.mxu0 0.0
        %405 = vmatpush1.msra.mxu0 0.0
        %406 = vmatprep.subr.mxu0 0.0
        %407 = vmatpush1.msra.mxu0 0.0
        %408 = vmatprep.subr.mxu0 0.0
        %409 = vmatpush1.msra.mxu0 0.0
        %410 = vmatprep.subr.mxu0 0.0
        %411 = vmatpush1.msra.mxu0 0.0
        %412 = vmatprep.subr.mxu0 0.0
        %413 = vmatpush1.msra.mxu0 0.0
        %414 = vmatprep.subr.mxu0 0.0
        %415 = vmatpush1.msra.mxu0 0.0
        %416 = vmatprep.subr.mxu0 0.0
        %417 = vmatpush1.msra.mxu0 0.0
        %418 = vmatprep.subr.mxu0 0.0
        %419 = vmatpush1.msra.mxu0 0.0
        %420 = vmatprep.subr.mxu0 0.0
        %421 = vmatpush1.msra.mxu0 0.0
        %422 = vmatprep.subr.mxu0 0.0
        %423 = vmatpush1.msra.mxu0 0.0
        %424 = vmatprep.subr.mxu0 0.0
        %425 = vmatpush1.msra.mxu0 %v387
        %426 = vmatprep.subr.mxu0 0.0
        %427 = vmatpush2.msra.mxu0 0.0
        %428 = vmatprep.subr.mxu0 0.0
        %429 = vmatpush2.msra.mxu0 0.0
        %430 = vmatprep.subr.mxu0 0.0
        %431 = vmatpush2.msra.mxu0 0.0
        %432 = vmatprep.subr.mxu0 0.0
        %433 = vmatpush2.msra.mxu0 0.0
        %434 = vmatprep.subr.mxu0 0.0
        %435 = vmatpush2.msra.mxu0 0.0
        %436 = vmatprep.subr.mxu0 0.0
        %437 = vmatpush2.msra.mxu0 0.0
        %438 = vmatprep.subr.mxu0 0.0
        %439 = vmatpush2.msra.mxu0 0.0
        %440 = vmatprep.subr.mxu0 0.0
        %441 = vmatpush2.msra.mxu0 0.0
        %442 = vmatprep.subr.mxu0 0.0
        %443 = vmatpush2.msra.mxu0 0.0
        %444 = vmatprep.subr.mxu0 0.0
        %445 = vmatpush2.msra.mxu0 0.0
        %446 = vmatprep.subr.mxu0 0.0
        %447 = vmatpush2.msra.mxu0 0.0
        %448 = vmatprep.subr.mxu0 0.0
        %449 = vmatpush2.msra.mxu0 0.0
        %450 = vmatprep.subr.mxu0 0.0
        %451 = vmatpush2.msra.mxu0 0.0
        %452 = vmatprep.subr.mxu0 0.0
        %453 = vmatpush2.msra.mxu0 0.0
        %454 = vmatprep.subr.mxu0 0.0
        %455 = vmatpush2.msra.mxu0 0.0
        %456 = vmatprep.subr.mxu0 0.0
        %457 = vmatpush2.msra.mxu0 0.0
        %458 = vmatprep.mubr.f32.mxu0 0.0
        %459 = vmatmul.mubr.f32.gmra.mxu0 %v390
        %v460 = vpop.f32.mrf.mxu0
        %v461 = vadd.f32 0.0, %v460
        %v462 = vpop.f32.mrf.mxu0
        %463 = vmatprep.mubr.f32.mxu0 0.0
        %464 = vmatmul.mubr.f32.gmra.mxu0 %v392
        %v465 = vpop.f32.mrf.mxu0
        %v466 = vadd.f32 0.0, %v465
        %v467 = vpop.f32.mrf.mxu0
        %468 = vdwg.mxu0
        %v469 = vsel %vm388, %v366, 0
        %v471 = vsel %vm388, %v367, 0
        %473 = vmatprep.subr.mxu0 0.0
        %474 = vmatpush1.msra.mxu0 0.0
        %475 = vmatprep.subr.mxu0 0.0
        %476 = vmatpush1.msra.mxu0 0.0
        %477 = vmatprep.subr.mxu0 0.0
        %478 = vmatpush1.msra.mxu0 0.0
        %479 = vmatprep.subr.mxu0 0.0
        %480 = vmatpush1.msra.mxu0 0.0
        %481 = vmatprep.subr.mxu0 0.0
        %482 = vmatpush1.msra.mxu0 0.0
        %483 = vmatprep.subr.mxu0 0.0
        %484 = vmatpush1.msra.mxu0 0.0
        %485 = vmatprep.subr.mxu0 0.0
        %486 = vmatpush1.msra.mxu0 0.0
        %487 = vmatprep.subr.mxu0 0.0
        %488 = vmatpush1.msra.mxu0 0.0
        %489 = vmatprep.subr.mxu0 0.0
        %490 = vmatpush1.msra.mxu0 0.0
        %491 = vmatprep.subr.mxu0 0.0
        %492 = vmatpush1.msra.mxu0 0.0
        %493 = vmatprep.subr.mxu0 0.0
        %494 = vmatpush1.msra.mxu0 0.0
        %495 = vmatprep.subr.mxu0 0.0
        %496 = vmatpush1.msra.mxu0 0.0
        %497 = vmatprep.subr.mxu0 0.0
        %498 = vmatpush1.msra.mxu0 0.0
        %499 = vmatprep.subr.mxu0 0.0
        %500 = vmatpush1.msra.mxu0 0.0
        %501 = vmatprep.subr.mxu0 0.0
        %502 = vmatpush1.msra.mxu0 0.0
        %503 = vmatprep.subr.mxu0 0.0
        %504 = vmatpush1.msra.mxu0 %v386
        %505 = vmatprep.subr.mxu0 0.0
        %506 = vmatpush2.msra.mxu0 0.0
        %507 = vmatprep.subr.mxu0 0.0
        %508 = vmatpush2.msra.mxu0 0.0
        %509 = vmatprep.subr.mxu0 0.0
        %510 = vmatpush2.msra.mxu0 0.0
        %511 = vmatprep.subr.mxu0 0.0
        %512 = vmatpush2.msra.mxu0 0.0
        %513 = vmatprep.subr.mxu0 0.0
        %514 = vmatpush2.msra.mxu0 0.0
        %515 = vmatprep.subr.mxu0 0.0
        %516 = vmatpush2.msra.mxu0 0.0
        %517 = vmatprep.subr.mxu0 0.0
        %518 = vmatpush2.msra.mxu0 0.0
        %519 = vmatprep.subr.mxu0 0.0
        %520 = vmatpush2.msra.mxu0 0.0
        %521 = vmatprep.subr.mxu0 0.0
        %522 = vmatpush2.msra.mxu0 0.0
        %523 = vmatprep.subr.mxu0 0.0
        %524 = vmatpush2.msra.mxu0 0.0
        %525 = vmatprep.subr.mxu0 0.0
        %526 = vmatpush2.msra.mxu0 0.0
        %527 = vmatprep.subr.mxu0 0.0
        %528 = vmatpush2.msra.mxu0 0.0
        %529 = vmatprep.subr.mxu0 0.0
        %530 = vmatpush2.msra.mxu0 0.0
        %531 = vmatprep.subr.mxu0 0.0
        %532 = vmatpush2.msra.mxu0 0.0
        %533 = vmatprep.subr.mxu0 0.0
        %534 = vmatpush2.msra.mxu0 0.0
        %535 = vmatprep.subr.mxu0 0.0
        %536 = vmatpush2.msra.mxu0 0.0
        %537 = vmatprep.mubr.f32.mxu0 0.0
        %538 = vmatmul.mubr.f32.gmra.mxu0 %v469
        %v539 = vpop.f32.mrf.mxu0
        %v540 = vadd.f32 %v461, %v539
        %v541 = vpop.f32.mrf.mxu0
        %542 = vmatprep.mubr.f32.mxu0 0.0
        %543 = vmatmul.mubr.f32.gmra.mxu0 %v471
        %v544 = vpop.f32.mrf.mxu0
        %v545 = vadd.f32 %v466, %v544
        %v546 = vpop.f32.mrf.mxu0
        %547 = vdwg.mxu0
        %v548 = vld [vmem:[%s5] sm:$0xff]
        %v549 = vsel %vm388, %v380, 0
        %v552 = vsel %vm388, %v383, 0
        %554 = vmatprep.subr.mxu0 0.0
        %555 = vmatpush1.msra.mxu0 0.0
        %556 = vmatprep.subr.mxu0 0.0
        %557 = vmatpush1.msra.mxu0 0.0
        %558 = vmatprep.subr.mxu0 0.0
        %559 = vmatpush1.msra.mxu0 0.0
        %560 = vmatprep.subr.mxu0 0.0
        %561 = vmatpush1.msra.mxu0 0.0
        %562 = vmatprep.subr.mxu0 0.0
        %563 = vmatpush1.msra.mxu0 0.0
        %564 = vmatprep.subr.mxu0 0.0
        %565 = vmatpush1.msra.mxu0 0.0
        %566 = vmatprep.subr.mxu0 0.0
        %567 = vmatpush1.msra.mxu0 0.0
        %568 = vmatprep.subr.mxu0 0.0
        %569 = vmatpush1.msra.mxu0 0.0
        %570 = vmatprep.subr.mxu0 0.0
        %571 = vmatpush1.msra.mxu0 0.0
        %572 = vmatprep.subr.mxu0 0.0
        %573 = vmatpush1.msra.mxu0 0.0
        %574 = vmatprep.subr.mxu0 0.0
        %575 = vmatpush1.msra.mxu0 0.0
        %576 = vmatprep.subr.mxu0 0.0
        %577 = vmatpush1.msra.mxu0 0.0
        %578 = vmatprep.subr.mxu0 0.0
        %579 = vmatpush1.msra.mxu0 0.0
        %580 = vmatprep.subr.mxu0 0.0
        %581 = vmatpush1.msra.mxu0 0.0
        %582 = vmatprep.subr.mxu0 0.0
        %583 = vmatpush1.msra.mxu0 0.0
        %584 = vmatprep.subr.mxu0 0.0
        %585 = vmatpush1.msra.mxu0 %v548
        %586 = vmatprep.subr.mxu0 0.0
        %587 = vmatpush2.msra.mxu0 0.0
        %588 = vmatprep.subr.mxu0 0.0
        %589 = vmatpush2.msra.mxu0 0.0
        %590 = vmatprep.subr.mxu0 0.0
        %591 = vmatpush2.msra.mxu0 0.0
        %592 = vmatprep.subr.mxu0 0.0
        %593 = vmatpush2.msra.mxu0 0.0
        %594 = vmatprep.subr.mxu0 0.0
        %595 = vmatpush2.msra.mxu0 0.0
        %596 = vmatprep.subr.mxu0 0.0
        %597 = vmatpush2.msra.mxu0 0.0
        %598 = vmatprep.subr.mxu0 0.0
        %599 = vmatpush2.msra.mxu0 0.0
        %600 = vmatprep.subr.mxu0 0.0
        %601 = vmatpush2.msra.mxu0 0.0
        %602 = vmatprep.subr.mxu0 0.0
        %603 = vmatpush2.msra.mxu0 0.0
        %604 = vmatprep.subr.mxu0 0.0
        %605 = vmatpush2.msra.mxu0 0.0
        %606 = vmatprep.subr.mxu0 0.0
        %607 = vmatpush2.msra.mxu0 0.0
        %608 = vmatprep.subr.mxu0 0.0
        %609 = vmatpush2.msra.mxu0 0.0
        %610 = vmatprep.subr.mxu0 0.0
        %611 = vmatpush2.msra.mxu0 0.0
        %612 = vmatprep.subr.mxu0 0.0
        %613 = vmatpush2.msra.mxu0 0.0
        %614 = vmatprep.subr.mxu0 0.0
        %615 = vmatpush2.msra.mxu0 0.0
        %616 = vmatprep.subr.mxu0 0.0
        %617 = vmatpush2.msra.mxu0 0.0
        %618 = vmatprep.mubr.f32.mxu0 0.0
        %619 = vmatmul.mubr.f32.gmra.mxu0 %v549
        %v620 = vpop.f32.mrf.mxu0
        %v621 = vadd.f32 0.0, %v620
        %v622 = vpop.f32.mrf.mxu0
        %623 = vmatprep.mubr.f32.mxu0 0.0
        %624 = vmatmul.mubr.f32.gmra.mxu0 %v552
        %v625 = vpop.f32.mrf.mxu0
        %v626 = vadd.f32 0.0, %v625
        %v627 = vpop.f32.mrf.mxu0
        %628 = vdwg.mxu0
        %v629 = vadd.f32 %v540, %v621
        %v630 = vadd.f32 %v545, %v626
        %v631 = vld [vmem:[%s6] sm:$0x1f]
        %vm632 = vcmask 39936
        %v634 = vsel %vm632, %v384, 0
        %v637 = vsel %vm632, %v385, 0
        %vm639 = vcmask 1044480
        %v641 = vsel %vm639, %v631, 0
        %643 = vmatprep.subr.mxu0 0.0
        %644 = vmatpush1.msra.mxu0 0.0
        %645 = vmatprep.subr.mxu0 0.0
        %646 = vmatpush1.msra.mxu0 0.0
        %647 = vmatprep.subr.mxu0 0.0
        %648 = vmatpush1.msra.mxu0 0.0
        %649 = vmatprep.subr.mxu0 0.0
        %650 = vmatpush1.msra.mxu0 0.0
        %651 = vmatprep.subr.mxu0 0.0
        %652 = vmatpush1.msra.mxu0 0.0
        %653 = vmatprep.subr.mxu0 0.0
        %654 = vmatpush1.msra.mxu0 0.0
        %655 = vmatprep.subr.mxu0 0.0
        %656 = vmatpush1.msra.mxu0 0.0
        %657 = vmatprep.subr.mxu0 0.0
        %658 = vmatpush1.msra.mxu0 0.0
        %659 = vmatprep.subr.mxu0 0.0
        %660 = vmatpush1.msra.mxu0 0.0
        %661 = vmatprep.subr.mxu0 0.0
        %662 = vmatpush1.msra.mxu0 0.0
        %663 = vmatprep.subr.mxu0 0.0
        %664 = vmatpush1.msra.mxu0 0.0
        %665 = vmatprep.subr.mxu0 0.0
        %666 = vmatpush1.msra.mxu0 0.0
        %667 = vmatprep.subr.mxu0 0.0
        %668 = vmatpush1.msra.mxu0 0.0
        %669 = vmatprep.subr.mxu0 0.0
        %670 = vmatpush1.msra.mxu0 0.0
        %671 = vmatprep.subr.mxu0 0.0
        %672 = vmatpush1.msra.mxu0 0.0
        %673 = vmatprep.subr.mxu0 0.0
        %674 = vmatpush1.msra.mxu0 %v641
        %675 = vmatprep.subr.mxu0 0.0
        %676 = vmatpush2.msra.mxu0 0.0
        %677 = vmatprep.subr.mxu0 0.0
        %678 = vmatpush2.msra.mxu0 0.0
        %679 = vmatprep.subr.mxu0 0.0
        %680 = vmatpush2.msra.mxu0 0.0
        %681 = vmatprep.subr.mxu0 0.0
        %682 = vmatpush2.msra.mxu0 0.0
        %683 = vmatprep.subr.mxu0 0.0
        %684 = vmatpush2.msra.mxu0 0.0
        %685 = vmatprep.subr.mxu0 0.0
        %686 = vmatpush2.msra.mxu0 0.0
        %687 = vmatprep.subr.mxu0 0.0
        %688 = vmatpush2.msra.mxu0 0.0
        %689 = vmatprep.subr.mxu0 0.0
        %690 = vmatpush2.msra.mxu0 0.0
        %691 = vmatprep.subr.mxu0 0.0
        %692 = vmatpush2.msra.mxu0 0.0
        %693 = vmatprep.subr.mxu0 0.0
        %694 = vmatpush2.msra.mxu0 0.0
        %695 = vmatprep.subr.mxu0 0.0
        %696 = vmatpush2.msra.mxu0 0.0
        %697 = vmatprep.subr.mxu0 0.0
        %698 = vmatpush2.msra.mxu0 0.0
        %699 = vmatprep.subr.mxu0 0.0
        %700 = vmatpush2.msra.mxu0 0.0
        %701 = vmatprep.subr.mxu0 0.0
        %702 = vmatpush2.msra.mxu0 0.0
        %703 = vmatprep.subr.mxu0 0.0
        %704 = vmatpush2.msra.mxu0 0.0
        %705 = vmatprep.subr.mxu0 0.0
        %706 = vmatpush2.msra.mxu0 0.0
        %707 = vmatprep.mubr.f32.mxu0 0.0
        %708 = vmatmul.mubr.f32.gmra.mxu0 %v634
        %v709 = vpop.f32.mrf.mxu0
        %v710 = vadd.f32 0.0, %v709
        %v711 = vpop.f32.mrf.mxu0
        %712 = vmatprep.mubr.f32.mxu0 0.0
        %713 = vmatmul.mubr.f32.gmra.mxu0 %v637
        %v714 = vpop.f32.mrf.mxu0
        %v715 = vadd.f32 0.0, %v714
        %v716 = vpop.f32.mrf.mxu0
        %717 = vdwg.mxu0
        %v718 = vadd.f32 %v629, %v710
        %v719 = vadd.f32 %v630, %v715
        %v720 = vld [vmem:[%s363] sm:$0xff]
        %v721 = vld [vmem:[%s363 + $0x8] sm:$0xff]
        %v722 = vadd.f32 %v718, %v720
        %v723 = vadd.f32 %v719, %v721
        %vm724 = vcmask 261120
        %725 = vst.msk [vmem:[%s338] sm:$0xff] %vm724, %v722
        %726 = vst.msk [vmem:[%s338 + $0x8] sm:$0xff] %vm724, %v723
        %s727 = sand.u32 %s209, 1
        %s728 = scalar_lea.sflag [#allocation3], %s727
        %s729 = sand.u32 %s209, 1
        %s730 = smul.addr %s729, 16
        %s731 = scalar_lea.vmem [#allocation2], %s730
        // Predicated region
        $region49: #{tpu_custom_call.1} parent=47 // pred_check
          %p732 = pneg %p219
        $region50: #{tpu_custom_call.1} parent=47 // pred_check_branch
          %734 = sbr.rel (%p732) target = $region52
        $region51: #{tpu_custom_call.1} parent=47 // pred_region
          %s735 = smul.u32 2, %s25
          %s737 = ssub.s32 256, 256
          %738 = vsyncadd %s728, %s737
          %s739 = smul.addr %s26, 2
          %s740 = sadd.s32 %s735, %s739
          %s741 = smul.addr %s740, 128
          %s742 = scalar_lea.hbm %s7, %s741
          %s743 = sshll.u32 %s731, 4
          %s744 = int_to_ptr.vmem [resolvable:$true] %s743
          %749 = dma.vmem_to_hbm [thread:$0]  %s744, 256, %s742, %s728, 128, 128, 8
        $region52: #{tpu_custom_call.1} parent=47 // pred_fallthru
          _
      $region48: #{tpu_custom_call.1} parent=5 // pred_fallthru
        _
      %p750 = scmp.le.s32.totalorder 2, %s16
      // Predicated region
      $region53: #{tpu_custom_call.1} parent=5 // pred_check
        %p751 = pneg %p750
      $region54: #{tpu_custom_call.1} parent=5 // pred_check_branch
        %753 = sbr.rel (%p751) target = $region56
      $region55: #{tpu_custom_call.1} parent=5 // pred_region
        %s754 = ssub.s32 %s16, 2
        // Predicated region
        $region57: #{tpu_custom_call.1} parent=55 // pred_check
          %p755 = pneg %p225
        $region58: #{tpu_custom_call.1} parent=55 // pred_check_branch
          %757 = sbr.rel (%p755) target = $region60
        $region59: #{tpu_custom_call.1} parent=55 // pred_region
          %s758 = sand.u32 %s210, 1
          %s759 = scalar_lea.sflag [#allocation3], %s758
          %s760 = sand.u32 %s210, 1
          %s761 = smul.addr %s760, 16
          %s762 = scalar_lea.vmem [#allocation2], %s761
          %763 = dma.done %s759, 256
        $region60: #{tpu_custom_call.1} parent=55 // pred_fallthru
          _
      $region56: #{tpu_custom_call.1} parent=5 // pred_fallthru
        _
    $region6: #{tpu_custom_call.1} parent=1 // loop_footer
      %s20 = sadd.s32 1, %s16
    $region7: #{tpu_custom_call.1} parent=1 // loop_footer_branch
      %15 = sbr.rel target = $region3
    $region8: #{tpu_custom_call.1} parent=1 // loop_exit
      _
    %764 = vsyncpa [#allocation3], 1
    %s765 = scalar_lea.sflag [#allocation3], 1
    %766 = vsyncpa %s765, 1

</llo_original>
